<compile_context>
chip_gen: v7x
topology: tpu7x:2x2x1
jax: 0.10.0
libtpu: 0.0.40
codegen_flags: <defaults>
</compile_context>

<pallas_src>
import jax
import jax.numpy as jnp
from jax.experimental import pallas as pl
from jax.experimental.pallas import tpu as pltpu


def _round_up(x, m):
    return ((x + m - 1) // m) * m


def _default_tile_rows():
    """Generation-aware default row-tile (folded rows)."""
    try:
        kind = jax.devices()[0].device_kind.lower()
    except Exception:
        return 4096
    if "v6" in kind or "v7" in kind or "7x" in kind:
        # 4 MiB f32 tile; double-buffered in+out = 16 MiB, fits the 32 MiB scoped VMEM.
        return 8192
    # v5e (16 MiB default scoped VMEM) and unknown chips: keep 2 MiB tiles.
    return 4096


def channel_attention_kernel(x_ref, w1_ref, b1_ref, w2_ref, b2_ref, y_ref):
    # x tile: (TM, W) where W = F*C lanes (lane-dense when C < 128).
    x = x_ref[...]
    xf = x.astype(jnp.float32)
    # fc[0]: Linear(C -> C//r)  (F-times block-diagonal weight when folded)
    h = jnp.dot(xf, w1_ref[...], preferred_element_type=jnp.float32) + b1_ref[...]
    # fc[1]: ReLU
    h = jnp.maximum(h, 0.0)
    # fc[2]: Linear(C//r -> C)
    o = jnp.dot(h, w2_ref[...], preferred_element_type=jnp.float32) + b2_ref[...]
    # sigmoid gate (EUP), elementwise multiply with the input tile
    g = jax.nn.sigmoid(o)
    y_ref[...] = (xf * g).astype(y_ref.dtype)


def fold_params(w1, b1, w2, b2):
    """Build the lane-dense (block-diagonal) weights ONCE per parameter set.

    w1: (C, C//r), b1: (C//r,), w2: (C//r, C), b2: (C,) — weights pre-transposed
    to (in, out) so the kernel computes plain x @ W.
    """
    C, H = w1.shape
    F = 128 // C if (C < 128 and 128 % C == 0) else 1
    if F > 1:
        eye = jnp.eye(F, dtype=w1.dtype)
        w1_k = jnp.kron(eye, w1)                     # (F*C, F*H) block-diagonal
        w2_k = jnp.kron(eye.astype(w2.dtype), w2)    # (F*H, F*C) block-diagonal
        b1_k = jnp.tile(b1, F)
        b2_k = jnp.tile(b2, F)
    else:
        w1_k, w2_k, b1_k, b2_k = w1, w2, b1, b2
    return {
        "F": F, "C": C, "H": H,
        "w1": w1_k, "b1": b1_k.reshape(1, F * H),
        "w2": w2_k, "b2": b2_k.reshape(1, F * C),
    }


def channel_attention(x, params, *, tile_rows=None, target_grid_steps=4):
    """x: (..., C) channels-last; params: output of fold_params()."""
    F, C, H = params["F"], params["C"], params["H"]
    Wc, Wh = F * C, F * H

    orig_shape = x.shape
    x2 = x.reshape(-1, C)
    M = x2.shape[0]

    # Pad at most F-1 rows so rows fold evenly into the 128-lane axis.
    rem = M % F
    if rem:
        # Zero rows are inert: 0 * sigmoid(bias-only) = 0, sliced off below.
        x2 = jnp.pad(x2, ((0, F - rem), (0, 0)))
    Mf = x2.shape[0] // F
    xf = x2.reshape(Mf, Wc)

    # ---- row tiling ----
    itemsize = jnp.dtype(x.dtype).itemsize
    sub = {4: 8, 2: 16, 1: 32}.get(itemsize, 8)
    if tile_rows is None:
        tile_rows = _default_tile_rows()
    # Keep >= target_grid_steps tiles so v7x's two TCs both get work and the
    # pipeline has something to overlap, but never exceed tile_rows.
    TM = min(tile_rows, max(sub, _round_up(pl.cdiv(Mf, target_grid_steps), sub)))
    if TM >= Mf:
        TM = Mf  # single full-extent block (exempt from the x8 sublane rule)
    grid = (pl.cdiv(Mf, TM),)

    # ---- honest advisory cost (block-diagonal folded matmuls, padded rows) ----
    w_itemsize = jnp.dtype(params["w1"].dtype).itemsize
    w_bytes = (params["w1"].size + params["w2"].size
               + params["b1"].size + params["b2"].size) * w_itemsize
    cost = pl.CostEstimate(
        flops=4 * Mf * Wc * Wh,            # two (Mf, Wc, Wh) matmuls
        transcendentals=Mf * Wc,           # sigmoid
        bytes_accessed=2 * Mf * Wc * itemsize + w_bytes,
    )

    yf = pl.pallas_call(
        channel_attention_kernel,
        out_shape=jax.ShapeDtypeStruct((Mf, Wc), x.dtype),
        grid=grid,
        in_specs=[
            pl.BlockSpec((TM, Wc), lambda i: (i, 0)),    # streamed x tile
            pl.BlockSpec((Wc, Wh), lambda i: (0, 0)),    # weights/biases: VMEM-resident
            pl.BlockSpec((1, Wh), lambda i: (0, 0)),
            pl.BlockSpec((Wh, Wc), lambda i: (0, 0)),
            pl.BlockSpec((1, Wc), lambda i: (0, 0)),
        ],
        out_specs=pl.BlockSpec((TM, Wc), lambda i: (i, 0)),
        compiler_params=pltpu.CompilerParams(
            dimension_semantics=("parallel",)),
        cost_estimate=cost,
    )(xf, params["w1"], params["b1"], params["w2"], params["b2"])

    y = yf.reshape(Mf * F, C)
    if rem:
        y = y[:M]
    return y.reshape(orig_shape)


def init_params(key, in_channels, reduction_ratio=4):
    """Deterministic init matching nn.Linear shapes (weights stored pre-transposed
    as (in, out) so the kernel can use plain x @ W)."""
    hidden = in_channels // reduction_ratio
    k1, k2, k3, k4 = jax.random.split(key, 4)
    bound1 = 1.0 / (in_channels ** 0.5)
    bound2 = 1.0 / (hidden ** 0.5)
    w1 = jax.random.uniform(k1, (in_channels, hidden), jnp.float32, -bound1, bound1)
    b1 = jax.random.uniform(k2, (hidden,), jnp.float32, -bound1, bound1)
    w2 = jax.random.uniform(k3, (hidden, in_channels), jnp.float32, -bound2, bound2)
    b2 = jax.random.uniform(k4, (in_channels,), jnp.float32, -bound2, bound2)
    return w1, b1, w2, b2


def channel_attention_ref(x, w1, b1, w2, b2):
    h = jnp.maximum(x @ w1 + b1, 0.0)
    g = jax.nn.sigmoid(h @ w2 + b2)
    return x * g


if __name__ == "__main__":
    key = jax.random.PRNGKey(0)
    kx, kp = jax.random.split(key)

    B, N, C = 2, 8, 32          # batch=2, seq=8, in_channels=32 (reduction 4 -> hidden 8)
    x = jax.random.normal(kx, (B, N, C), jnp.float32)
    w1, b1, w2, b2 = init_params(kp, C, reduction_ratio=4)

    folded = fold_params(w1, b1, w2, b2)     # built once per parameter set
    y = channel_attention(x, folded)
    y = jax.block_until_ready(y)

    y_ref = channel_attention_ref(x, w1, b1, w2, b2)
    assert y.shape == x.shape
    assert jnp.allclose(y, y_ref, atol=1e-4, rtol=1e-4), "mismatch vs reference"

    print("KERNEL_OK")
</pallas_src>

<mosaic_0001>
module attributes {stable_mosaic.version = 11 : i64} {
  func.func @channel_attention_kernel(%arg0: i32, %arg1: memref<4x128xf32, #tpu.memory_space<vmem>>, %arg2: memref<128x32xf32, #tpu.memory_space<vmem>>, %arg3: memref<1x32xf32, #tpu.memory_space<vmem>>, %arg4: memref<32x128xf32, #tpu.memory_space<vmem>>, %arg5: memref<1x128xf32, #tpu.memory_space<vmem>>, %arg6: memref<4x128xf32, #tpu.memory_space<vmem>>) attributes {dimension_semantics = [#tpu.dimension_semantics<parallel>], iteration_bounds = array<i64: 1>, scalar_prefetch = 0 : i64, scratch_operands = 0 : i64, tpu.core_type = #tpu.core_type<tc>, window_params = [{transform_indices = @transform_0, window_bounds = array<i64: 4, 128>}, {pipeline_mode = #tpu.pipeline_mode<synchronous>, transform_indices = @transform_1, window_bounds = array<i64: 128, 32>}, {pipeline_mode = #tpu.pipeline_mode<synchronous>, transform_indices = @transform_2, window_bounds = array<i64: 1, 32>}, {pipeline_mode = #tpu.pipeline_mode<synchronous>, transform_indices = @transform_3, window_bounds = array<i64: 32, 128>}, {pipeline_mode = #tpu.pipeline_mode<synchronous>, transform_indices = @transform_4, window_bounds = array<i64: 1, 128>}, {transform_indices = @transform_5, window_bounds = array<i64: 4, 128>}]} {
    %c0 = arith.constant 0 : index
    %c0_0 = arith.constant 0 : index
    %0 = vector.load %arg1[%c0, %c0_0] : memref<4x128xf32, #tpu.memory_space<vmem>>, vector<4x128xf32>
    %c0_1 = arith.constant 0 : index
    %c0_2 = arith.constant 0 : index
    %1 = vector.load %arg2[%c0_1, %c0_2] : memref<128x32xf32, #tpu.memory_space<vmem>>, vector<128x32xf32>
    %cst = arith.constant dense<0.000000e+00> : vector<4x32xf32>
    %2 = tpu.matmul %0, %1, %cst {dimension_numbers = #tpu.dot_dimension_numbers<[1], [0], [0], [1], [0, 0, 1, 1], [], []>} : vector<4x128xf32>, vector<128x32xf32>, vector<4x32xf32> -> vector<4x32xf32>
    %c0_3 = arith.constant 0 : index
    %c0_4 = arith.constant 0 : index
    %3 = vector.load %arg3[%c0_3, %c0_4] : memref<1x32xf32, #tpu.memory_space<vmem>>, vector<1x32xf32>
    %4 = vector.broadcast %3 : vector<1x32xf32> to vector<4x32xf32>
    %5 = arith.addf %2, %4 : vector<4x32xf32>
    %cst_5 = arith.constant 0.000000e+00 : f32
    %6 = vector.broadcast %cst_5 : f32 to vector<4x32xf32>
    %7 = arith.maximumf %5, %6 : vector<4x32xf32>
    %c0_6 = arith.constant 0 : index
    %c0_7 = arith.constant 0 : index
    %8 = vector.load %arg4[%c0_6, %c0_7] : memref<32x128xf32, #tpu.memory_space<vmem>>, vector<32x128xf32>
    %cst_8 = arith.constant dense<0.000000e+00> : vector<4x128xf32>
    %9 = tpu.matmul %7, %8, %cst_8 {dimension_numbers = #tpu.dot_dimension_numbers<[1], [0], [0], [1], [0, 0, 1, 1], [], []>} : vector<4x32xf32>, vector<32x128xf32>, vector<4x128xf32> -> vector<4x128xf32>
    %c0_9 = arith.constant 0 : index
    %c0_10 = arith.constant 0 : index
    %10 = vector.load %arg5[%c0_9, %c0_10] : memref<1x128xf32, #tpu.memory_space<vmem>>, vector<1x128xf32>
    %11 = vector.broadcast %10 : vector<1x128xf32> to vector<4x128xf32>
    %12 = arith.addf %9, %11 : vector<4x128xf32>
    %13 = arith.negf %12 : vector<4x128xf32>
    %14 = math.exp %13 : vector<4x128xf32>
    %cst_11 = arith.constant 1.000000e+00 : f32
    %15 = vector.broadcast %cst_11 : f32 to vector<4x128xf32>
    %16 = arith.addf %15, %14 : vector<4x128xf32>
    %17 = arith.divf %15, %16 : vector<4x128xf32>
    %18 = arith.mulf %0, %17 : vector<4x128xf32>
    %c0_12 = arith.constant 0 : index
    %c0_13 = arith.constant 0 : index
    %19 = vector.load %arg6[%c0_12, %c0_13] : memref<4x128xf32, #tpu.memory_space<vmem>>, vector<4x128xf32>
    tpu.vector_store %arg6[%c0_12, %c0_13], %18 {strides = array<i32>} : memref<4x128xf32, #tpu.memory_space<vmem>>, vector<4x128xf32>,
    return
  }
  func.func @transform_0(%arg0: i32) -> (i32, i32) {
    %c0_i32 = arith.constant 0 : i32
    %c0_i32_0 = arith.constant 0 : i32
    return %arg0, %c0_i32 : i32, i32
  }
  func.func @transform_1(%arg0: i32) -> (i32, i32) {
    %c0_i32 = arith.constant 0 : i32
    %c0_i32_0 = arith.constant 0 : i32
    %c0_i32_1 = arith.constant 0 : i32
    return %c0_i32, %c0_i32_0 : i32, i32
  }
  func.func @transform_2(%arg0: i32) -> (i32, i32) {
    %c0_i32 = arith.constant 0 : i32
    %c0_i32_0 = arith.constant 0 : i32
    %c0_i32_1 = arith.constant 0 : i32
    return %c0_i32, %c0_i32_0 : i32, i32
  }
  func.func @transform_3(%arg0: i32) -> (i32, i32) {
    %c0_i32 = arith.constant 0 : i32
    %c0_i32_0 = arith.constant 0 : i32
    %c0_i32_1 = arith.constant 0 : i32
    return %c0_i32, %c0_i32_0 : i32, i32
  }
  func.func @transform_4(%arg0: i32) -> (i32, i32) {
    %c0_i32 = arith.constant 0 : i32
    %c0_i32_0 = arith.constant 0 : i32
    %c0_i32_1 = arith.constant 0 : i32
    return %c0_i32, %c0_i32_0 : i32, i32
  }
  func.func @transform_5(%arg0: i32) -> (i32, i32) {
    %c0_i32 = arith.constant 0 : i32
    %c0_i32_0 = arith.constant 0 : i32
    return %arg0, %c0_i32 : i32, i32
  }
}

</mosaic_0001>

<llo_original>
// kernel: tpu_custom_call.1
$region0: #{tpu_custom_call.1}
  #allocation0 [shape = 'u32[]', space=smem, size = 0x4, offset = 0x4, fixed_abs, tag = 'smem constant byte address 0x4 - core index']
  #allocation1 [shape = 'u32[144,128]{1,0:T(1,128)}', space=vmem, size = 0x12000, scoped, tag = 'internal scratch']
  %s0 = inlined_call_operand.vmem [shape: f32[4,128], index: 0, kind: input, shape index: {}]
  %s1 = inlined_call_operand.vmem [shape: f32[128,32], index: 1, kind: input, shape index: {}]
  %s2 = inlined_call_operand.vmem [shape: f32[1,32], index: 2, kind: input, shape index: {}]
  %s3 = inlined_call_operand.vmem [shape: f32[32,128], index: 3, kind: input, shape index: {}]
  %s4 = inlined_call_operand.vmem [shape: f32[1,128], index: 4, kind: input, shape index: {}]
  %s5 = inlined_call_operand.hbm [shape: f32[4,128], index: 5, kind: output, shape index: {}]
  %s6 = sld [smem:[#allocation0]]
  $region30: #{tpu_custom_call.1} parent=0
    _
  %s8 = ssub.s32 1, %s6
  %s9 = scalar_select 0, %s8, %s6
  $region1: #{tpu_custom_call.1} parent=0
    #allocation2 [shape = 'u8[2048]{0}', space=vmem, size = 0x800, scoped, tag = 'output window, operand 0, single buffered']
    #allocation3 [shape = 's32[1]{0}', space=sflag, size = 0x4, scoped, tag = 'scoped memory for tpu_custom_call.1']
    %10 = vsyncpa [#allocation3], 0
    // Predicated region
    $region2: #{tpu_custom_call.1} parent=1 // pred_check
      _
    $region3: #{tpu_custom_call.1} parent=1 // pred_check_branch
      %12 = sbr.rel (0) target = $region5
    $region4: #{tpu_custom_call.1} parent=1 // pred_region
      _
    $region5: #{tpu_custom_call.1} parent=1 // pred_fallthru
      _
    // Predicated region
    $region6: #{tpu_custom_call.1} parent=1 // pred_check
      _
    $region7: #{tpu_custom_call.1} parent=1 // pred_check_branch
      %14 = sbr.rel (0) target = $region9
    $region8: #{tpu_custom_call.1} parent=1 // pred_region
      _
    $region9: #{tpu_custom_call.1} parent=1 // pred_fallthru
      _
    // Predicated region
    $region10: #{tpu_custom_call.1} parent=1 // pred_check
      _
    $region11: #{tpu_custom_call.1} parent=1 // pred_check_branch
      %16 = sbr.rel (0) target = $region13
    $region12: #{tpu_custom_call.1} parent=1 // pred_region
      _
    $region13: #{tpu_custom_call.1} parent=1 // pred_fallthru
      _
    // Predicated region
    $region14: #{tpu_custom_call.1} parent=1 // pred_check
      _
    $region15: #{tpu_custom_call.1} parent=1 // pred_check_branch
      %18 = sbr.rel (0) target = $region17
    $region16: #{tpu_custom_call.1} parent=1 // pred_region
      _
    $region17: #{tpu_custom_call.1} parent=1 // pred_fallthru
      _
    // Predicated region
    $region18: #{tpu_custom_call.1} parent=1 // pred_check
      _
    $region19: #{tpu_custom_call.1} parent=1 // pred_check_branch
      %20 = sbr.rel (0) target = $region21
    $region20: #{tpu_custom_call.1} parent=1 // pred_region
      _
    $region21: #{tpu_custom_call.1} parent=1 // pred_fallthru
      _
    %v21 = vld [vmem:[%s0] sm:$0xf]
    %v22 = vld [vmem:[%s1] sm:$0xff]
    %v23 = vld [vmem:[%s1 + $0x8] sm:$0xff]
    %v24 = vld [vmem:[%s1 + $0x10] sm:$0xff]
    %v25 = vld [vmem:[%s1 + $0x18] sm:$0xff]
    %v26 = vld [vmem:[%s1 + $0x20] sm:$0xff]
    %v27 = vld [vmem:[%s1 + $0x28] sm:$0xff]
    %v28 = vld [vmem:[%s1 + $0x30] sm:$0xff]
    %v29 = vld [vmem:[%s1 + $0x38] sm:$0xff]
    %v30 = vld [vmem:[%s1 + $0x40] sm:$0xff]
    %v31 = vld [vmem:[%s1 + $0x48] sm:$0xff]
    %v32 = vld [vmem:[%s1 + $0x50] sm:$0xff]
    %v33 = vld [vmem:[%s1 + $0x58] sm:$0xff]
    %v34 = vld [vmem:[%s1 + $0x60] sm:$0xff]
    %v35 = vld [vmem:[%s1 + $0x68] sm:$0xff]
    %v36 = vld [vmem:[%s1 + $0x70] sm:$0xff]
    %v37 = vld [vmem:[%s1 + $0x78] sm:$0xff]
    %v38 = vld [vmem:[%s2] sm:$0x1]
    %v40 = vlaneseq
    %v41 = vshrl.u32 %v40, 7
    %v42 = vsub.s32 0, %v41
    %v43 = vrot.slane %v38, %v42
    %45 = vmatprep.subr.mxu0 0.0
    %46 = vmatpush1.msra.mxu0 %v22
    %47 = vmatprep.subr.mxu0 0.0
    %48 = vmatpush1.msra.mxu0 %v23
    %49 = vmatprep.subr.mxu0 0.0
    %50 = vmatpush1.msra.mxu0 %v24
    %51 = vmatprep.subr.mxu0 0.0
    %52 = vmatpush1.msra.mxu0 %v25
    %53 = vmatprep.subr.mxu0 0.0
    %54 = vmatpush1.msra.mxu0 %v26
    %55 = vmatprep.subr.mxu0 0.0
    %56 = vmatpush1.msra.mxu0 %v27
    %57 = vmatprep.subr.mxu0 0.0
    %58 = vmatpush1.msra.mxu0 %v28
    %59 = vmatprep.subr.mxu0 0.0
    %60 = vmatpush1.msra.mxu0 %v29
    %61 = vmatprep.subr.mxu0 0.0
    %62 = vmatpush1.msra.mxu0 %v30
    %63 = vmatprep.subr.mxu0 0.0
    %64 = vmatpush1.msra.mxu0 %v31
    %65 = vmatprep.subr.mxu0 0.0
    %66 = vmatpush1.msra.mxu0 %v32
    %67 = vmatprep.subr.mxu0 0.0
    %68 = vmatpush1.msra.mxu0 %v33
    %69 = vmatprep.subr.mxu0 0.0
    %70 = vmatpush1.msra.mxu0 %v34
    %71 = vmatprep.subr.mxu0 0.0
    %72 = vmatpush1.msra.mxu0 %v35
    %73 = vmatprep.subr.mxu0 0.0
    %74 = vmatpush1.msra.mxu0 %v36
    %75 = vmatprep.subr.mxu0 0.0
    %76 = vmatpush1.msra.mxu0 %v37
    %77 = vmatprep.subr.mxu0 0.0
    %78 = vmatpush1.msra.mxu0 0.0
    %79 = vmatprep.subr.mxu0 0.0
    %80 = vmatpush1.msra.mxu0 0.0
    %81 = vmatprep.subr.mxu0 0.0
    %82 = vmatpush1.msra.mxu0 0.0
    %83 = vmatprep.subr.mxu0 0.0
    %84 = vmatpush1.msra.mxu0 0.0
    %85 = vmatprep.subr.mxu0 0.0
    %86 = vmatpush1.msra.mxu0 0.0
    %87 = vmatprep.subr.mxu0 0.0
    %88 = vmatpush1.msra.mxu0 0.0
    %89 = vmatprep.subr.mxu0 0.0
    %90 = vmatpush1.msra.mxu0 0.0
    %91 = vmatprep.subr.mxu0 0.0
    %92 = vmatpush1.msra.mxu0 0.0
    %93 = vmatprep.subr.mxu0 0.0
    %94 = vmatpush1.msra.mxu0 0.0
    %95 = vmatprep.subr.mxu0 0.0
    %96 = vmatpush1.msra.mxu0 0.0
    %97 = vmatprep.subr.mxu0 0.0
    %98 = vmatpush1.msra.mxu0 0.0
    %99 = vmatprep.subr.mxu0 0.0
    %100 = vmatpush1.msra.mxu0 0.0
    %101 = vmatprep.subr.mxu0 0.0
    %102 = vmatpush1.msra.mxu0 0.0
    %103 = vmatprep.subr.mxu0 0.0
    %104 = vmatpush1.msra.mxu0 0.0
    %105 = vmatprep.subr.mxu0 0.0
    %106 = vmatpush1.msra.mxu0 0.0
    %107 = vmatprep.subr.mxu0 0.0
    %108 = vmatpush1.msra.mxu0 0.0
    %109 = vmatprep.mubr.f32.mxu0 0.0
    %110 = vmatmul.mubr.f32.gmra.mrb[0].mxu0 %v21
    %v111 = vpop.f32.mrb[0].mxu0
    %v112 = vadd.f32 %v43, %v111
    %v113 = vpop.f32.mrb[0].mxu0
    %114 = vdwg.mxu0
    %v115 = vmax.f32 %v112, 0.0
    %v116 = vld [vmem:[%s3] sm:$0xff]
    %v117 = vld [vmem:[%s3 + $0x8] sm:$0xff]
    %v118 = vld [vmem:[%s3 + $0x10] sm:$0xff]
    %v119 = vld [vmem:[%s3 + $0x18] sm:$0xff]
    %v120 = vld [vmem:[%s4] sm:$0x1]
    %v122 = vlaneseq
    %v123 = vshrl.u32 %v122, 7
    %v124 = vsub.s32 0, %v123
    %v125 = vrot.slane %v120, %v124
    %vm127 = vcmask 261120
    %v129 = vsel %vm127, %v115, 0
    %131 = vmatprep.subr.mxu0 0.0
    %132 = vmatpush1.msra.mxu0 %v116
    %133 = vmatprep.subr.mxu0 0.0
    %134 = vmatpush1.msra.mxu0 %v117
    %135 = vmatprep.subr.mxu0 0.0
    %136 = vmatpush1.msra.mxu0 %v118
    %137 = vmatprep.subr.mxu0 0.0
    %138 = vmatpush1.msra.mxu0 %v119
    %139 = vmatprep.subr.mxu0 0.0
    %140 = vmatpush1.msra.mxu0 0.0
    %141 = vmatprep.subr.mxu0 0.0
    %142 = vmatpush1.msra.mxu0 0.0
    %143 = vmatprep.subr.mxu0 0.0
    %144 = vmatpush1.msra.mxu0 0.0
    %145 = vmatprep.subr.mxu0 0.0
    %146 = vmatpush1.msra.mxu0 0.0
    %147 = vmatprep.subr.mxu0 0.0
    %148 = vmatpush1.msra.mxu0 0.0
    %149 = vmatprep.subr.mxu0 0.0
    %150 = vmatpush1.msra.mxu0 0.0
    %151 = vmatprep.subr.mxu0 0.0
    %152 = vmatpush1.msra.mxu0 0.0
    %153 = vmatprep.subr.mxu0 0.0
    %154 = vmatpush1.msra.mxu0 0.0
    %155 = vmatprep.subr.mxu0 0.0
    %156 = vmatpush1.msra.mxu0 0.0
    %157 = vmatprep.subr.mxu0 0.0
    %158 = vmatpush1.msra.mxu0 0.0
    %159 = vmatprep.subr.mxu0 0.0
    %160 = vmatpush1.msra.mxu0 0.0
    %161 = vmatprep.subr.mxu0 0.0
    %162 = vmatpush1.msra.mxu0 0.0
    %163 = vmatprep.subr.mxu0 0.0
    %164 = vmatpush1.msra.mxu0 0.0
    %165 = vmatprep.subr.mxu0 0.0
    %166 = vmatpush1.msra.mxu0 0.0
    %167 = vmatprep.subr.mxu0 0.0
    %168 = vmatpush1.msra.mxu0 0.0
    %169 = vmatprep.subr.mxu0 0.0
    %170 = vmatpush1.msra.mxu0 0.0
    %171 = vmatprep.subr.mxu0 0.0
    %172 = vmatpush1.msra.mxu0 0.0
    %173 = vmatprep.subr.mxu0 0.0
    %174 = vmatpush1.msra.mxu0 0.0
    %175 = vmatprep.subr.mxu0 0.0
    %176 = vmatpush1.msra.mxu0 0.0
    %177 = vmatprep.subr.mxu0 0.0
    %178 = vmatpush1.msra.mxu0 0.0
    %179 = vmatprep.subr.mxu0 0.0
    %180 = vmatpush1.msra.mxu0 0.0
    %181 = vmatprep.subr.mxu0 0.0
    %182 = vmatpush1.msra.mxu0 0.0
    %183 = vmatprep.subr.mxu0 0.0
    %184 = vmatpush1.msra.mxu0 0.0
    %185 = vmatprep.subr.mxu0 0.0
    %186 = vmatpush1.msra.mxu0 0.0
    %187 = vmatprep.subr.mxu0 0.0
    %188 = vmatpush1.msra.mxu0 0.0
    %189 = vmatprep.subr.mxu0 0.0
    %190 = vmatpush1.msra.mxu0 0.0
    %191 = vmatprep.subr.mxu0 0.0
    %192 = vmatpush1.msra.mxu0 0.0
    %193 = vmatprep.subr.mxu0 0.0
    %194 = vmatpush1.msra.mxu0 0.0
    %195 = vmatprep.mubr.f32.mxu0 0.0
    %196 = vmatmul.mubr.f32.gmra.mrb[0].mxu0 %v129
    %v197 = vpop.f32.mrb[0].mxu0
    %v198 = vadd.f32 %v125, %v197
    %v199 = vpop.f32.mrb[0].mxu0
    %200 = vdwg.mxu0
    %v201 = vxor.u32 %v198, 2147483648
    %v202 = vmul.f32 %v201, 1.442695
    %v203 = vpow.pop %v202
    %v204 = vadd.f32 %v203, 1.0
    %v205 = vrcp.pop %v204
    %v206 = vmul.f32 1.0, %v205
    %v207 = vmul.f32 %v21, %v206
    %208 = vst [vmem:[#allocation2] sm:$0xf] %v207
    // Predicated region
    $region22: #{tpu_custom_call.1} parent=1 // pred_check
      _
    $region23: #{tpu_custom_call.1} parent=1 // pred_check_branch
      %210 = sbr.rel (0) target = $region25
    $region24: #{tpu_custom_call.1} parent=1 // pred_region
      %s212 = ssub.s32 64, 64
      %213 = vsyncadd [#allocation3], %s212
      %s215 = sshll.u32 [#allocation2], 4
      %s216 = int_to_ptr.vmem [resolvable:$true] %s215
      %218 = dma.vmem_to_hbm [thread:$0]  %s216, 64, %s5, [#allocation3]
    $region25: #{tpu_custom_call.1} parent=1 // pred_fallthru
      _
    // Predicated region
    $region26: #{tpu_custom_call.1} parent=1 // pred_check
      _
    $region27: #{tpu_custom_call.1} parent=1 // pred_check_branch
      %220 = sbr.rel (0) target = $region29
    $region28: #{tpu_custom_call.1} parent=1 // pred_region
      %221 = dma.done [#allocation3], 64
    $region29: #{tpu_custom_call.1} parent=1 // pred_fallthru
      _
    %222 = vsyncpa [#allocation3], 1

</llo_original>
